<compile_context>
chip_gen: v7x
topology: tpu7x:2x2x1
jax: 0.10.0
libtpu: 0.0.40
codegen_flags: <defaults>
</compile_context>

<pallas_src>
import functools

import jax
import jax.numpy as jnp
from jax.experimental import pallas as pl
from jax.experimental.pallas import tpu as pltpu


def _round_up(n, m):
    return ((n + m - 1) // m) * m


def _vmem_capacity_bytes():
    try:
        return int(pltpu.get_tpu_info().vmem_capacity_bytes)
    except Exception:
        return 64 * 1024 * 1024  # conservative fallback (v7x per-core VMEM)


# ----------------------------- kernels ------------------------------------


def _silu_residual(x_res, y, out_dtype):
    # SiLU: exp on the EUP; approx reciprocal uses the EUP rcp slot instead of
    # a VPU Newton divide sequence (VALU is the binding slot for small H).
    sig = pl.reciprocal(1.0 + jnp.exp(-y), approx=True)
    return (x_res.astype(jnp.float32) + y * sig).astype(out_dtype)


def _fullwidth_kernel(x_ref, w_ref, b_ref, o_ref):
    # Weight fully resident (single-buffered); the x tile doubles as residual.
    x = x_ref[...]
    y = jnp.dot(x, w_ref[...], preferred_element_type=jnp.float32) + b_ref[...]
    o_ref[...] = _silu_residual(x, y, o_ref.dtype)


def _coltiled_kernel(x_ref, w_ref, b_ref, o_ref, *, tn):
    # x_ref is the full-K (tm, H) tile used for the matmul; the residual slice
    # for this output-column block is taken from it (no second HBM read of x).
    x = x_ref[...]
    y = jnp.dot(x, w_ref[...], preferred_element_type=jnp.float32) + b_ref[...]
    off = pl.multiple_of(pl.program_id(1) * tn, 128)
    x_res = x_ref[:, pl.ds(off, tn)]
    o_ref[...] = _silu_residual(x_res, y, o_ref.dtype)


# --------------------------- tiling heuristic ------------------------------


def _max_rows(tn, w_bufs, budget, H, isx, isw, iso):
    """Largest row tile whose VMEM footprint fits the budget."""
    fixed = w_bufs * H * tn * isw + 2 * tn * 4          # weight + f32 bias
    per_row = 2 * (H * isx + tn * iso)                  # x + out, double-buffered
    avail = budget - fixed
    return avail // per_row if avail > 0 else 0


def _choose_tiles(N, H, isx, isw, iso, tm_req, tn_req, budget):
    # Sublane multiple for the row tile (16 for bf16, 32 for int8/fp8).
    sub = max(8, 32 // min(isx, iso))
    n_rows = _round_up(max(N, 1), sub)
    tm_target = 512 if tm_req is None else tm_req

    def clamp_tm(max_rows, target):
        t = min(target, max(max_rows, sub), n_rows, 1024)
        return max(sub, (t // sub) * sub)

    if tn_req is not None:
        w_bufs = 1 if tn_req == H else 2
        return (clamp_tm(_max_rows(tn_req, w_bufs, budget, H, isx, isw, iso),
                         tm_target), tn_req)

    # Prefer a fully-resident, single-buffered weight (no re-streaming).
    max_rows = _max_rows(H, 1, budget, H, isx, isw, iso)
    if max_rows >= min(n_rows, 128):
        return clamp_tm(max_rows, tm_target), H

    # Column-tile the weight; take the widest tn (fills the 256-wide MXU on
    # v6e/v7x) that still leaves room for a big row tile, since the weight
    # re-streaming HBM traffic scales as 1/tm.
    best = None
    for tn in (512, 256, 128):
        if H % tn:
            continue
        tm_c = clamp_tm(_max_rows(tn, 2, budget, H, isx, isw, iso),
                        max(tm_target, 512))
        if tm_c >= 256:
            return tm_c, tn
        if best is None or tm_c > best[0]:
            best = (tm_c, tn)
    if best is None:  # H not a multiple of 128: keep the weight resident.
        best = (clamp_tm(_max_rows(H, 1, budget, H, isx, isw, iso), tm_target), H)
    return best


# ------------------------------ wrapper ------------------------------------


def resblock(x, w_t, b, *, tm=None, tn=None, mxu_dtype=jnp.bfloat16,
             vmem_limit_bytes=None):
    """y = x + SiLU(x @ w_t + b) over the last dim of x.

    x:   (..., H) activations (leading dims are flattened to rows).
    w_t: (H, H)   pre-transposed weight (W.T); the kernel computes x @ w_t.
    b:   (H,)     bias.
    tm/tn: optional row / output-column tiles (tn must divide H; tn < H must
           be a multiple of 128). Defaults derived from the VMEM budget.
    mxu_dtype: MXU operand dtype (default bf16 with f32 accumulation); pass
           jnp.float32 (or None to keep x.dtype) for full-precision operands.
    """
    orig_shape = x.shape
    H = orig_shape[-1]
    x2 = x.reshape(-1, H)
    N = x2.shape[0]
    out_dtype = x.dtype

    if mxu_dtype is None:
        mxu_dtype = x2.dtype
    mxu_dtype = jnp.dtype(mxu_dtype)
    # Wrapper-side casts: one pass, halves HBM traffic when bf16, and avoids
    # a repeated per-tile VPU cast inside the kernel.
    xp = x2 if x2.dtype == mxu_dtype else x2.astype(mxu_dtype)
    w_k = w_t if w_t.dtype == mxu_dtype else w_t.astype(mxu_dtype)
    b2 = b.reshape(1, H).astype(jnp.float32)

    isx = xp.dtype.itemsize
    isw = w_k.dtype.itemsize
    iso = jnp.dtype(out_dtype).itemsize

    cap = _vmem_capacity_bytes()
    budget = (cap * 3) // 4  # leave headroom for Mosaic internal scratch

    tm_eff, tn_eff = _choose_tiles(N, H, isx, isw, iso, tm, tn, budget)
    if tn_eff != H:
        assert H % tn_eff == 0, "tn must divide H"
        assert tn_eff % 128 == 0, "column tile must be a multiple of 128 lanes"
    gm = pl.cdiv(N, tm_eff)  # ragged edge block is masked by Pallas
    gn = H // tn_eff

    w_bufs = 1 if gn == 1 else 2
    footprint = (w_bufs * H * tn_eff * isw + 2 * tn_eff * 4
                 + 2 * tm_eff * H * isx + 2 * tm_eff * tn_eff * iso)
    if vmem_limit_bytes is None:
        vmem_limit_bytes = int(min(cap, max(32 * 1024 * 1024,
                                            footprint + footprint // 4
                                            + (1 << 20))))

    cost = pl.CostEstimate(
        flops=2 * N * H * H,
        transcendentals=N * H,
        bytes_accessed=(N * H * (isx + iso)
                        + H * H * isw * (gm if gn > 1 else 1) + H * 4))

    if gn == 1:
        kernel = _fullwidth_kernel
        grid = (gm,)
        in_specs = [
            pl.BlockSpec((tm_eff, H), lambda i: (i, 0)),            # x rows
            pl.BlockSpec((H, H), lambda i: (0, 0),
                         pipeline_mode=pl.Buffered(1)),             # weight, resident
            pl.BlockSpec((1, H), lambda i: (0, 0),
                         pipeline_mode=pl.Buffered(1)),             # bias, resident
        ]
        out_specs = pl.BlockSpec((tm_eff, H), lambda i: (i, 0))
        dim_sem = ("parallel",)
    else:
        kernel = functools.partial(_coltiled_kernel, tn=tn_eff)
        grid = (gm, gn)
        in_specs = [
            pl.BlockSpec((tm_eff, H), lambda i, j: (i, 0)),         # full-K x tile
            pl.BlockSpec((H, tn_eff), lambda i, j: (0, j)),         # weight col tile
            pl.BlockSpec((1, tn_eff), lambda i, j: (0, j)),         # bias col tile
        ]
        out_specs = pl.BlockSpec((tm_eff, tn_eff), lambda i, j: (i, j))
        # Only the row axis is "parallel": on v7x the 2 TCs shard disjoint row
        # ranges instead of both streaming the same full-K x tile.
        dim_sem = ("parallel", "arbitrary")

    out = pl.pallas_call(
        kernel,
        out_shape=jax.ShapeDtypeStruct((N, H), out_dtype),
        grid_spec=pltpu.PrefetchScalarGridSpec(
            num_scalar_prefetch=0,
            grid=grid,
            in_specs=in_specs,
            out_specs=out_specs),
        compiler_params=pltpu.CompilerParams(
            dimension_semantics=dim_sem,
            vmem_limit_bytes=vmem_limit_bytes),
        cost_estimate=cost,
    )(xp, w_k, b2)

    return out.reshape(orig_shape)


# ------------------------------ self-test ----------------------------------


def reference(x, w_t, b):
    H = x.shape[-1]
    y = jnp.dot(x.reshape(-1, H).astype(jnp.float32), w_t.astype(jnp.float32),
                precision=jax.lax.Precision.HIGHEST) + b.astype(jnp.float32)
    y = y.reshape(x.shape)
    return (x.astype(jnp.float32) + y * jax.nn.sigmoid(y)).astype(x.dtype)


def _bf16_representable(a):
    # Round test data to bf16-representable f32 values so every MXU precision
    # path (bf16 operands or f32 emulation) produces the same products.
    return a.astype(jnp.bfloat16).astype(jnp.float32)


def _init_params(key, hidden):
    # NOTE: the PyTorch module zero-inits the weight; the self-test uses a
    # random weight so the MXU path is actually validated.
    kw, kb = jax.random.split(key)
    bound = 1.0 / (hidden ** 0.5)
    w = jax.random.uniform(kw, (hidden, hidden), minval=-bound, maxval=bound,
                           dtype=jnp.float32)                 # (out, in)
    b = jax.random.uniform(kb, (hidden,), minval=-bound, maxval=bound,
                           dtype=jnp.float32)
    return _bf16_representable(w).T, _bf16_representable(b)   # W^T for x @ W^T


if __name__ == "__main__":
    key = jax.random.PRNGKey(0)
    k1, k2, k3, k4 = jax.random.split(key, 4)

    # Case 1: small shape (batch=2, seq=8, hidden=128); resident single-
    # buffered weight, single grid step, default bf16 MXU operands.
    x1 = _bf16_representable(jax.random.normal(k1, (2, 8, 128), dtype=jnp.float32))
    w_t1, b1 = _init_params(k2, 128)
    out1 = resblock(x1, w_t1, b1)
    jax.block_until_ready(out1)
    ref1 = reference(x1, w_t1, b1)
    assert out1.shape == x1.shape
    assert jnp.allclose(out1, ref1, atol=1e-2, rtol=1e-2), "mismatch (case 1)"

    # Case 2: ragged row count (N=150, tm=64 -> masked edge block) with forced
    # column tiling (tn=128 < H=256) and f32 MXU operands: exercises the
    # residual-slice-from-resident-x-tile path at tight tolerance.
    x2 = _bf16_representable(jax.random.normal(k3, (3, 50, 256), dtype=jnp.float32))
    w_t2, b2 = _init_params(k4, 256)
    out2 = resblock(x2, w_t2, b2, tm=64, tn=128, mxu_dtype=jnp.float32)
    jax.block_until_ready(out2)
    ref2 = reference(x2, w_t2, b2)
    assert out2.shape == x2.shape
    assert jnp.allclose(out2, ref2, atol=5e-3, rtol=5e-3), "mismatch (case 2)"

    # Case 3: same shape, default bf16 MXU path, resident weight, ragged edge
    # block through the fullwidth kernel.
    out3 = resblock(x2, w_t2, b2, tm=128)
    jax.block_until_ready(out3)
    assert out3.shape == x2.shape
    assert jnp.allclose(out3, ref2, atol=1e-2, rtol=1e-2), "mismatch (case 3)"

    print("KERNEL_OK")
</pallas_src>

<mosaic_0001>
module attributes {stable_mosaic.version = 11 : i64} {
  func.func @_fullwidth_kernel(%arg0: i32, %arg1: memref<16x128xbf16, #tpu.memory_space<vmem>>, %arg2: memref<128x128xbf16, #tpu.memory_space<vmem>>, %arg3: memref<1x128xf32, #tpu.memory_space<vmem>>, %arg4: memref<16x128xf32, #tpu.memory_space<vmem>>) attributes {dimension_semantics = [#tpu.dimension_semantics<parallel>], iteration_bounds = array<i64: 1>, scalar_prefetch = 0 : i64, scratch_operands = 0 : i64, tpu.core_type = #tpu.core_type<tc>, window_params = [{transform_indices = @transform_0, window_bounds = array<i64: 16, 128>}, {pipeline_mode = #tpu.pipeline_mode<synchronous>, transform_indices = @transform_1, window_bounds = array<i64: 128, 128>}, {pipeline_mode = #tpu.pipeline_mode<synchronous>, transform_indices = @transform_2, window_bounds = array<i64: 1, 128>}, {transform_indices = @transform_3, window_bounds = array<i64: 16, 128>}]} {
    %c0 = arith.constant 0 : index
    %c0_0 = arith.constant 0 : index
    %0 = vector.load %arg1[%c0, %c0_0] : memref<16x128xbf16, #tpu.memory_space<vmem>>, vector<16x128xbf16>
    %c0_1 = arith.constant 0 : index
    %c0_2 = arith.constant 0 : index
    %1 = vector.load %arg2[%c0_1, %c0_2] : memref<128x128xbf16, #tpu.memory_space<vmem>>, vector<128x128xbf16>
    %cst = arith.constant dense<0.000000e+00> : vector<16x128xf32>
    %2 = tpu.matmul %0, %1, %cst {dimension_numbers = #tpu.dot_dimension_numbers<[1], [0], [0], [1], [0, 0, 1, 1], [], []>} : vector<16x128xbf16>, vector<128x128xbf16>, vector<16x128xf32> -> vector<16x128xf32>
    %c0_3 = arith.constant 0 : index
    %c0_4 = arith.constant 0 : index
    %3 = vector.load %arg3[%c0_3, %c0_4] : memref<1x128xf32, #tpu.memory_space<vmem>>, vector<1x128xf32>
    %4 = vector.broadcast %3 : vector<1x128xf32> to vector<16x128xf32>
    %5 = arith.addf %2, %4 : vector<16x128xf32>
    %cst_5 = arith.constant 0.000000e+00 : f32
    %6 = vector.broadcast %cst_5 : f32 to vector<16x128xf32>
    %7 = arith.subf %6, %5 : vector<16x128xf32>
    %8 = math.exp %7 : vector<16x128xf32>
    %cst_6 = arith.constant 1.000000e+00 : f32
    %9 = vector.broadcast %cst_6 : f32 to vector<16x128xf32>
    %10 = arith.addf %9, %8 : vector<16x128xf32>
    %11 = tpu.reciprocal %10 {approx = true} : vector<16x128xf32> -> vector<16x128xf32>
    %12 = arith.extf %0 : vector<16x128xbf16> to vector<16x128xf32>
    %13 = arith.mulf %5, %11 : vector<16x128xf32>
    %14 = arith.addf %12, %13 : vector<16x128xf32>
    %c0_7 = arith.constant 0 : index
    %c0_8 = arith.constant 0 : index
    %15 = vector.load %arg4[%c0_7, %c0_8] : memref<16x128xf32, #tpu.memory_space<vmem>>, vector<16x128xf32>
    tpu.vector_store %arg4[%c0_7, %c0_8], %14 {strides = array<i32>} : memref<16x128xf32, #tpu.memory_space<vmem>>, vector<16x128xf32>,
    return
  }
  func.func @transform_0(%arg0: i32) -> (i32, i32) {
    %c0_i32 = arith.constant 0 : i32
    %c0_i32_0 = arith.constant 0 : i32
    return %arg0, %c0_i32 : i32, i32
  }
  func.func @transform_1(%arg0: i32) -> (i32, i32) {
    %c0_i32 = arith.constant 0 : i32
    %c0_i32_0 = arith.constant 0 : i32
    %c0_i32_1 = arith.constant 0 : i32
    return %c0_i32, %c0_i32_0 : i32, i32
  }
  func.func @transform_2(%arg0: i32) -> (i32, i32) {
    %c0_i32 = arith.constant 0 : i32
    %c0_i32_0 = arith.constant 0 : i32
    %c0_i32_1 = arith.constant 0 : i32
    return %c0_i32, %c0_i32_0 : i32, i32
  }
  func.func @transform_3(%arg0: i32) -> (i32, i32) {
    %c0_i32 = arith.constant 0 : i32
    %c0_i32_0 = arith.constant 0 : i32
    return %arg0, %c0_i32 : i32, i32
  }
}

</mosaic_0001>

<llo_original>
// kernel: tpu_custom_call.1
$region0: #{tpu_custom_call.1}
  #allocation0 [shape = 'u32[]', space=smem, size = 0x4, offset = 0x4, fixed_abs, tag = 'smem constant byte address 0x4 - core index']
  #allocation1 [shape = 'u32[144,128]{1,0:T(1,128)}', space=vmem, size = 0x12000, scoped, tag = 'internal scratch']
  %s0 = inlined_call_operand.hbm [shape: bf16[16,128], index: 0, kind: input, shape index: {}]
  %s1 = inlined_call_operand.hbm [shape: bf16[128,128], index: 1, kind: input, shape index: {}]
  %s2 = inlined_call_operand.vmem [shape: f32[1,128], index: 2, kind: input, shape index: {}]
  %s3 = inlined_call_operand.hbm [shape: f32[16,128], index: 3, kind: output, shape index: {}]
  %s4 = sld [smem:[#allocation0]]
  $region30: #{tpu_custom_call.1} parent=0
    _
  %s6 = ssub.s32 1, %s4
  %s7 = scalar_select 0, %s6, %s4
  $region1: #{tpu_custom_call.1} parent=0
    #allocation2 [shape = 'u8[4096]{0}', space=vmem, size = 0x1000, scoped, tag = 'input window, operand 0, single buffered']
    #allocation3 [shape = 's32[1]{0}', space=sflag, size = 0x4, scoped, tag = 'scoped memory for tpu_custom_call.1']
    #allocation4 [shape = 's32[1]{0}', space=sflag, size = 0x4, scoped, tag = 'scoped memory for tpu_custom_call.1']
    #allocation5 [shape = 'u8[32768]{0}', space=vmem, size = 0x8000, scoped, tag = 'input window, operand 1, single buffered']
    #allocation6 [shape = 's32[1]{0}', space=sflag, size = 0x4, scoped, tag = 'scoped memory for tpu_custom_call.1']
    #allocation7 [shape = 'u8[8192]{0}', space=vmem, size = 0x2000, scoped, tag = 'output window, operand 0, single buffered']
    %8 = vsyncpa [#allocation3], 0
    %9 = vsyncpa [#allocation6], 0
    %10 = vsyncpa [#allocation4], 0
    // Predicated region
    $region2: #{tpu_custom_call.1} parent=1 // pred_check
      _
    $region3: #{tpu_custom_call.1} parent=1 // pred_check_branch
      %12 = sbr.rel (0) target = $region5
    $region4: #{tpu_custom_call.1} parent=1 // pred_region
      %s14 = ssub.s32 128, 128
      %15 = vsyncadd [#allocation3], %s14
      %s16 = sshll.u32 [#allocation2], 4
      %s17 = int_to_ptr.vmem [resolvable:$true] %s16
      %22 = dma.hbm_to_vmem [thread:$0]  %s0, 128, %s17, [#allocation3], 64, 64, 4
    $region5: #{tpu_custom_call.1} parent=1 // pred_fallthru
      _
    // Predicated region
    $region6: #{tpu_custom_call.1} parent=1 // pred_check
      _
    $region7: #{tpu_custom_call.1} parent=1 // pred_check_branch
      %24 = sbr.rel (0) target = $region9
    $region8: #{tpu_custom_call.1} parent=1 // pred_region
      %s26 = ssub.s32 1024, 1024
      %27 = vsyncadd [#allocation6], %s26
      %s28 = sshll.u32 [#allocation5], 4
      %s29 = int_to_ptr.vmem [resolvable:$true] %s28
      %34 = dma.hbm_to_vmem [thread:$0]  %s1, 1024, %s29, [#allocation6], 64, 64, 4
    $region9: #{tpu_custom_call.1} parent=1 // pred_fallthru
      _
    // Predicated region
    $region10: #{tpu_custom_call.1} parent=1 // pred_check
      _
    $region11: #{tpu_custom_call.1} parent=1 // pred_check_branch
      %36 = sbr.rel (0) target = $region13
    $region12: #{tpu_custom_call.1} parent=1 // pred_region
      _
    $region13: #{tpu_custom_call.1} parent=1 // pred_fallthru
      _
    // Predicated region
    $region14: #{tpu_custom_call.1} parent=1 // pred_check
      _
    $region15: #{tpu_custom_call.1} parent=1 // pred_check_branch
      %38 = sbr.rel (0) target = $region17
    $region16: #{tpu_custom_call.1} parent=1 // pred_region
      %39 = dma.done [#allocation3], 128
    $region17: #{tpu_custom_call.1} parent=1 // pred_fallthru
      _
    // Predicated region
    $region18: #{tpu_custom_call.1} parent=1 // pred_check
      _
    $region19: #{tpu_custom_call.1} parent=1 // pred_check_branch
      %41 = sbr.rel (0) target = $region21
    $region20: #{tpu_custom_call.1} parent=1 // pred_region
      %42 = dma.done [#allocation6], 1024
    $region21: #{tpu_custom_call.1} parent=1 // pred_fallthru
      _
    %v44 = vld [vmem:[#allocation2] sm:$0xf]
    %v45 = vld [vmem:[#allocation2 + $0x4] sm:$0xf]
    %v46 = vld [vmem:[#allocation5] sm:$0xf]
    %v47 = vld [vmem:[#allocation5 + $0x4] sm:$0xf]
    %v48 = vld [vmem:[#allocation5 + $0x8] sm:$0xf]
    %v49 = vld [vmem:[#allocation5 + $0xc] sm:$0xf]
    %v50 = vld [vmem:[#allocation5 + $0x10] sm:$0xf]
    %v51 = vld [vmem:[#allocation5 + $0x14] sm:$0xf]
    %v52 = vld [vmem:[#allocation5 + $0x18] sm:$0xf]
    %v53 = vld [vmem:[#allocation5 + $0x1c] sm:$0xf]
    %v54 = vld [vmem:[#allocation5 + $0x20] sm:$0xf]
    %v55 = vld [vmem:[#allocation5 + $0x24] sm:$0xf]
    %v56 = vld [vmem:[#allocation5 + $0x28] sm:$0xf]
    %v57 = vld [vmem:[#allocation5 + $0x2c] sm:$0xf]
    %v58 = vld [vmem:[#allocation5 + $0x30] sm:$0xf]
    %v59 = vld [vmem:[#allocation5 + $0x34] sm:$0xf]
    %v60 = vld [vmem:[#allocation5 + $0x38] sm:$0xf]
    %v61 = vld [vmem:[#allocation5 + $0x3c] sm:$0xf]
    %v62 = vld [vmem:[%s2] sm:$0x1]
    %v64 = vlaneseq
    %v65 = vshrl.u32 %v64, 7
    %v66 = vsub.s32 0, %v65
    %v67 = vrot.slane %v62, %v66
    %v71 = vunpack.c.l.b16 %v44
    %v72 = vunpack.c.l.b16 %v45
    %v73 = vpack.c.b16 %v72, %v71
    %v91 = vunpack.c.l.b16 %v46
    %v92 = vunpack.c.l.b16 %v47
    %v93 = vunpack.c.l.b16 %v48
    %v94 = vunpack.c.l.b16 %v49
    %v95 = vunpack.c.l.b16 %v50
    %v96 = vunpack.c.l.b16 %v51
    %v97 = vunpack.c.l.b16 %v52
    %v98 = vunpack.c.l.b16 %v53
    %v99 = vunpack.c.l.b16 %v54
    %v100 = vunpack.c.l.b16 %v55
    %v101 = vunpack.c.l.b16 %v56
    %v102 = vunpack.c.l.b16 %v57
    %v103 = vunpack.c.l.b16 %v58
    %v104 = vunpack.c.l.b16 %v59
    %v105 = vunpack.c.l.b16 %v60
    %v106 = vunpack.c.l.b16 %v61
    %v107 = vpack.c.b16 %v92, %v91
    %v108 = vpack.c.b16 %v94, %v93
    %v109 = vpack.c.b16 %v96, %v95
    %v110 = vpack.c.b16 %v98, %v97
    %v111 = vpack.c.b16 %v100, %v99
    %v112 = vpack.c.b16 %v102, %v101
    %v113 = vpack.c.b16 %v104, %v103
    %v114 = vpack.c.b16 %v106, %v105
    %123 = vmatprep.subr.bf16.mxu0 0
    %124 = vmatpush1.bf16.msra.mxu0 %v107
    %125 = vmatprep.subr.bf16.mxu0 0
    %126 = vmatpush1.bf16.msra.mxu0 %v108
    %127 = vmatprep.subr.bf16.mxu0 0
    %128 = vmatpush1.bf16.msra.mxu0 %v109
    %129 = vmatprep.subr.bf16.mxu0 0
    %130 = vmatpush1.bf16.msra.mxu0 %v110
    %131 = vmatprep.subr.bf16.mxu0 0
    %132 = vmatpush1.bf16.msra.mxu0 %v111
    %133 = vmatprep.subr.bf16.mxu0 0
    %134 = vmatpush1.bf16.msra.mxu0 %v112
    %135 = vmatprep.subr.bf16.mxu0 0
    %136 = vmatpush1.bf16.msra.mxu0 %v113
    %137 = vmatprep.subr.bf16.mxu0 0
    %138 = vmatpush1.bf16.msra.mxu0 %v114
    %139 = vmatprep.subr.bf16.mxu0 0
    %140 = vmatpush1.bf16.msra.mxu0 0
    %141 = vmatprep.subr.bf16.mxu0 0
    %142 = vmatpush1.bf16.msra.mxu0 0
    %143 = vmatprep.subr.bf16.mxu0 0
    %144 = vmatpush1.bf16.msra.mxu0 0
    %145 = vmatprep.subr.bf16.mxu0 0
    %146 = vmatpush1.bf16.msra.mxu0 0
    %147 = vmatprep.subr.bf16.mxu0 0
    %148 = vmatpush1.bf16.msra.mxu0 0
    %149 = vmatprep.subr.bf16.mxu0 0
    %150 = vmatpush1.bf16.msra.mxu0 0
    %151 = vmatprep.subr.bf16.mxu0 0
    %152 = vmatpush1.bf16.msra.mxu0 0
    %153 = vmatprep.subr.bf16.mxu0 0
    %154 = vmatpush1.bf16.msra.mxu0 0
    %155 = vmatprep.mubr.bf16.mxu0 0
    %156 = vmatmul.mubr.bf16.gmra.mrb[0].mxu0 %v73
    %v157 = vpop.f32.mrb[0].mxu0
    %v158 = vadd.f32 %v67, %v157
    %v159 = vpop.f32.mrb[0].mxu0
    %v160 = vpop.f32.mrb[0].mxu0
    %v161 = vadd.f32 %v67, %v160
    %v162 = vpop.f32.mrb[0].mxu0
    %163 = vdwg.mxu0
    %v164 = vsub.f32 0.0, %v158
    %v165 = vsub.f32 0.0, %v161
    %v166 = vmul.f32 %v164, 1.442695
    %v167 = vpow.pop %v166
    %v168 = vmul.f32 %v165, 1.442695
    %v169 = vpow.pop %v168
    %v170 = vadd.f32 %v167, 1.0
    %v171 = vadd.f32 %v169, 1.0
    %v172 = vrcp.pop %v170
    %v173 = vrcp.pop %v171
    %v174 = vunpack.c.l.bf16 %v44
    %v175 = vunpack.c.l.bf16 %v45
    %v176 = vmul.f32 %v158, %v172
    %v177 = vmul.f32 %v161, %v173
    %v178 = vadd.f32 %v174, %v176
    %v179 = vadd.f32 %v175, %v177
    %180 = vst [vmem:[#allocation7] sm:$0xff] %v178
    %181 = vst [vmem:[#allocation7 + $0x8] sm:$0xff] %v179
    // Predicated region
    $region22: #{tpu_custom_call.1} parent=1 // pred_check
      _
    $region23: #{tpu_custom_call.1} parent=1 // pred_check_branch
      %183 = sbr.rel (0) target = $region25
    $region24: #{tpu_custom_call.1} parent=1 // pred_region
      %s185 = ssub.s32 256, 256
      %186 = vsyncadd [#allocation4], %s185
      %s187 = sshll.u32 [#allocation7], 4
      %s188 = int_to_ptr.vmem [resolvable:$true] %s187
      %193 = dma.vmem_to_hbm [thread:$0]  %s188, 256, %s3, [#allocation4], 128, 128, 8
    $region25: #{tpu_custom_call.1} parent=1 // pred_fallthru
      _
    // Predicated region
    $region26: #{tpu_custom_call.1} parent=1 // pred_check
      _
    $region27: #{tpu_custom_call.1} parent=1 // pred_check_branch
      %195 = sbr.rel (0) target = $region29
    $region28: #{tpu_custom_call.1} parent=1 // pred_region
      %196 = dma.done [#allocation4], 256
    $region29: #{tpu_custom_call.1} parent=1 // pred_fallthru
      _
    %197 = vsyncpa [#allocation3], 1
    %198 = vsyncpa [#allocation6], 1
    %199 = vsyncpa [#allocation4], 1

</llo_original>
